<compile_context>
chip_gen: v7x
topology: tpu7x:2x2x1
jax: 0.10.0
libtpu: 0.0.40
codegen_flags: <defaults>
</compile_context>

<pallas_src>
import functools

import jax
import jax.numpy as jnp
import numpy as np
from jax import lax
from jax.experimental import pallas as pl
from jax.experimental.pallas import tpu as pltpu

_IDENT_FLAT = (1.0, 0.0, 0.0, 0.0, 1.0, 0.0, 0.0, 0.0, 1.0)
_MATS_PER_ROW = 128                 # matrices packed along the lane axis per sublane row
_LANES = _MATS_PER_ROW * 9          # 1152 lanes (multiple of 128)
_ROW_ALIGN = 32                     # sublane-row multiple (covers f32/bf16/int8 packing)
_CHUNK = 8                          # sublane rows per unrolled inner step (1 vreg/plane)
_UNROLL = 2                         # manual inner-loop unroll (review: keep <= 2)
_MIN_GRID = 4                       # aim for >= 4 grid steps (v7x 2 TCs + pipelining)
_VMEM_INPUT_BUDGET = 9 << 20        # bytes across (all inputs x 2 pipeline buffers);
                                    # fits v5e's 16 MiB scoped-VMEM default with headroom.


def _cdiv(a, b):
    return -(-a // b)


def _round_up(x, m):
    return _cdiv(x, m) * m


# ----------------------------------------------------------------------------
# Kernels
# ----------------------------------------------------------------------------
def _no_target_kernel(x_ref, out_ref):
    """x_ref: (TR, 1152) -- 128 row-major-flattened 3x3 matrices per sublane row.

    Writes the block's sum of ||R - I||_F^2, broadcast across 128 lanes."""
    tr = x_ref.shape[0]
    # Identity pattern (1,0,0,0,1,0,0,0,1) tiled along the 1152 lanes, built ONCE
    # at full (CHUNK, LANES) shape (hoisted: no per-iteration broadcast_in_dim).
    lane = lax.broadcasted_iota(jnp.int32, (_CHUNK, _LANES), 1) % 9
    ident = jnp.where((lane == 0) | (lane == 4) | (lane == 8),
                      1.0, 0.0).astype(jnp.float32)

    def body(c, acc):
        base = c * (_CHUNK * _UNROLL)
        for u in range(_UNROLL):                               # manual 2x unroll
            r0 = pl.multiple_of(base + u * _CHUNK, _CHUNK)
            d = x_ref[pl.ds(r0, _CHUNK), :].astype(jnp.float32) - ident
            acc = acc + d * d                                  # lane-dense VPU FMAs
        return acc

    acc = lax.fori_loop(0, tr // (_CHUNK * _UNROLL), body,
                        jnp.zeros((_CHUNK, _LANES), jnp.float32))
    out_ref[...] = jnp.full((1, 128), jnp.sum(acc), jnp.float32)


def _with_target_kernel(a_ref, b_ref, out_ref):
    """a_ref, b_ref: (9, TR, 128) entry-plane-major blocks.

    Entry plane e = 3*k + i holds element [k, i] of TR*128 matrices, so
    C[i, j] = sum_k a[3k+i] * b[3k+j] is 3 full-lane-width FMAs per vreg.
    Writes the block's sum of ||A^T B - I||_F^2, broadcast across 128 lanes."""
    tr = a_ref.shape[1]

    def body(c, acc):
        base = c * (_CHUNK * _UNROLL)
        for u in range(_UNROLL):                               # manual 2x unroll
            r0 = pl.multiple_of(base + u * _CHUNK, _CHUNK)
            a = [a_ref[e, pl.ds(r0, _CHUNK), :].astype(jnp.float32) for e in range(9)]
            b = [b_ref[e, pl.ds(r0, _CHUNK), :].astype(jnp.float32) for e in range(9)]
            # TODO(synk): for bf16 inputs on v7x (where this flips VALU-bound),
            # doing the a*b products in bf16 with f32 accumulation only would
            # restore the DMA roofline at ~1e-3 relative loss change; kept f32
            # here to preserve numerics.
            sq = []
            for i in range(3):
                for j in range(3):
                    cij = a[i] * b[j] + a[3 + i] * b[3 + j] + a[6 + i] * b[6 + j]
                    d = cij - 1.0 if i == j else cij
                    sq.append(d * d)
            # Balanced-tree sum of the 9 independent squares: the carried
            # accumulator sees a single add per sub-chunk (short FMA chain).
            while len(sq) > 1:
                nxt = [sq[k] + sq[k + 1] for k in range(0, len(sq) - 1, 2)]
                if len(sq) % 2:
                    nxt.append(sq[-1])
                sq = nxt
            acc = acc + sq[0]
        return acc

    acc = lax.fori_loop(0, tr // (_CHUNK * _UNROLL), body,
                        jnp.zeros((_CHUNK, _MATS_PER_ROW), jnp.float32))
    out_ref[...] = jnp.full((1, 128), jnp.sum(acc), jnp.float32)


# ----------------------------------------------------------------------------
# Wrapper
# ----------------------------------------------------------------------------
def _layout(num_mats, itemsize, num_inputs):
    """Rows-per-block, padded row count and grid for `num_mats` matrices.

    Block rows are sized from a fixed VMEM budget (all inputs, double-buffered):
      f32: 1024 rows (1 input) / 512 rows (2 inputs); bf16: 2048 / 1024.
    tr is additionally clamped so big batches yield >= _MIN_GRID grid steps."""
    rows = max(_cdiv(num_mats, _MATS_PER_ROW), 1)
    bytes_per_row = num_inputs * _LANES * itemsize
    max_rows = max(_ROW_ALIGN,
                   (_VMEM_INPUT_BUDGET // (2 * bytes_per_row))
                   // _ROW_ALIGN * _ROW_ALIGN)
    tr = min(max_rows, _round_up(_cdiv(rows, _MIN_GRID), _ROW_ALIGN))
    rows_pad = _round_up(rows, tr)
    return tr, rows_pad, rows_pad // tr


def _pad_flat(x, m_pad):
    """(*, 3, 3) -> (m_pad, 9) row-major, padded with identity matrices.

    Identity padding contributes exactly 0 to both loss variants."""
    x = x.reshape(-1, 9)
    m = x.shape[0]
    if m_pad > m:
        pad = jnp.broadcast_to(jnp.asarray(_IDENT_FLAT, dtype=x.dtype)[None, :],
                               (m_pad - m, 9))
        x = jnp.concatenate([x, pad], axis=0)
    return x


@functools.partial(jax.jit, static_argnames=("reduction",))
def orthogonal_loss(inputs, targets=None, reduction="mean"):
    """JAX/Pallas implementation of vision3d orthogonal_loss."""
    if inputs.shape[-2:] != (3, 3):
        raise ValueError(f"inputs must have shape (*, 3, 3), got {inputs.shape}")
    if targets is not None and targets.shape != inputs.shape:
        raise ValueError(
            f"targets shape {targets.shape} must match inputs shape {inputs.shape}")

    m_true = inputs.size // 9
    num_inputs = 1 if targets is None else 2
    itemsize = np.dtype(inputs.dtype).itemsize
    tr, rows_pad, grid = _layout(m_true, itemsize, num_inputs)
    m_pad = rows_pad * _MATS_PER_ROW

    out_shape = jax.ShapeDtypeStruct((1, grid * 128), jnp.float32)
    out_spec = pl.BlockSpec((1, 128), lambda r: (0, r))
    cparams = pltpu.CompilerParams(dimension_semantics=("parallel",))

    if targets is None:
        # Lane-dense interleaved layout: (rows_pad, 1152), 128 matrices per row.
        x = _pad_flat(inputs, m_pad).reshape(rows_pad, _LANES)
        cost = pl.CostEstimate(flops=27 * m_pad, transcendentals=0,
                               bytes_accessed=9 * m_pad * itemsize + grid * 128 * 4)
        partials = pl.pallas_call(
            _no_target_kernel,
            grid=(grid,),
            in_specs=[pl.BlockSpec((tr, _LANES), lambda r: (r, 0))],
            out_specs=out_spec,
            out_shape=out_shape,
            compiler_params=cparams,
            cost_estimate=cost,
        )(x)
    else:
        # Entry-plane-major layout (9, rows_pad, 128).  This restage costs one
        # extra HBM read+write of each input; kept because the in-kernel
        # roll/select deinterleave alternative is XLU/VALU-bound above the v7x
        # DMA floor (see header).
        # TODO(synk): accept plane-major rotations from upstream producers to
        # delete this wrapper-side transpose entirely.
        a = jnp.transpose(
            _pad_flat(inputs, m_pad).reshape(rows_pad, _MATS_PER_ROW, 9), (2, 0, 1))
        b = jnp.transpose(
            _pad_flat(targets, m_pad).reshape(rows_pad, _MATS_PER_ROW, 9), (2, 0, 1))
        in_spec = pl.BlockSpec((9, tr, _MATS_PER_ROW), lambda r: (0, r, 0))
        cost = pl.CostEstimate(flops=66 * m_pad, transcendentals=0,
                               bytes_accessed=2 * 9 * m_pad * itemsize + grid * 128 * 4)
        partials = pl.pallas_call(
            _with_target_kernel,
            grid=(grid,),
            in_specs=[in_spec, in_spec],
            out_specs=out_spec,
            out_shape=out_shape,
            compiler_params=cparams,
            cost_estimate=cost,
        )(a, b)

    total = jnp.sum(partials.reshape(grid, 128)[:, 0])
    if reduction == "mean":
        # NOTE: m_true == 0 yields 0/0 = nan, same as torch mse_loss on empty input.
        loss = total / jnp.float32(m_true * 9)
    elif reduction == "sum":
        loss = total
    else:
        # TODO(synk): reduction='none' (per-element tensor output) is not
        # implemented in this Pallas path.
        raise NotImplementedError("reduction='none' not supported in this Pallas kernel")
    # Match PyTorch: result dtype follows inputs (accumulation was f32).
    return loss.astype(inputs.dtype)


class OrthogonalLoss:
    def __init__(self, reduction: str = "mean"):
        self.reduction = reduction

    def __call__(self, inputs, targets=None):
        return orthogonal_loss(inputs, targets=targets, reduction=self.reduction)


# ----------------------------------------------------------------------------
# Pure-JAX reference (mirrors the PyTorch code)
# ----------------------------------------------------------------------------
def _ref_orthogonal_loss(inputs, targets=None):
    if targets is not None:
        inputs = jnp.matmul(jnp.swapaxes(inputs, -1, -2), targets)
    inputs = inputs.reshape(-1, 3, 3)
    ident = jnp.eye(3, dtype=inputs.dtype)[None, :, :]
    return jnp.mean((inputs - ident) ** 2)


if __name__ == "__main__":
    key = jax.random.PRNGKey(0)
    k1, k2, k3, k4 = jax.random.split(key, 4)

    loss_fn = OrthogonalLoss(reduction="mean")
    sum_fn = OrthogonalLoss(reduction="sum")

    # Small shapes consistent with the module: (*, 3, 3) with leading batch (2, 4).
    inputs = jax.random.normal(k1, (2, 4, 3, 3), dtype=jnp.float32)
    targets = jax.random.normal(k2, (2, 4, 3, 3), dtype=jnp.float32)

    # Case 1: no target -> mean || R - I ||^2
    loss_no_tgt = loss_fn(inputs)
    jax.block_until_ready(loss_no_tgt)
    np.testing.assert_allclose(np.asarray(loss_no_tgt),
                               np.asarray(_ref_orthogonal_loss(inputs)),
                               rtol=1e-5, atol=1e-5)

    # Case 2: with target -> mean || R^T R* - I ||^2
    loss_tgt = loss_fn(inputs, targets)
    jax.block_until_ready(loss_tgt)
    np.testing.assert_allclose(np.asarray(loss_tgt),
                               np.asarray(_ref_orthogonal_loss(inputs, targets)),
                               rtol=1e-5, atol=1e-5)

    # Case 3: 'sum' reduction
    loss_sum = sum_fn(inputs, targets)
    jax.block_until_ready(loss_sum)
    np.testing.assert_allclose(np.asarray(loss_sum),
                               np.asarray(_ref_orthogonal_loss(inputs, targets)) * inputs.size,
                               rtol=1e-5, atol=1e-4)

    # Case 4: multi-block batch (grid > 1) exercising the pipelined parallel grid.
    big_a = jax.random.normal(k3, (16384, 3, 3), dtype=jnp.float32)
    big_b = jax.random.normal(k4, (16384, 3, 3), dtype=jnp.float32)
    big_no_tgt = loss_fn(big_a)
    big_tgt = loss_fn(big_a, big_b)
    jax.block_until_ready((big_no_tgt, big_tgt))
    np.testing.assert_allclose(np.asarray(big_no_tgt),
                               np.asarray(_ref_orthogonal_loss(big_a)),
                               rtol=1e-4, atol=1e-5)
    np.testing.assert_allclose(np.asarray(big_tgt),
                               np.asarray(_ref_orthogonal_loss(big_a, big_b)),
                               rtol=1e-4, atol=1e-5)

    print("KERNEL_OK")
</pallas_src>

<mosaic_0001>
module attributes {stable_mosaic.version = 11 : i64} {
  func.func @_no_target_kernel(%arg0: i32, %arg1: memref<32x1152xf32, #tpu.memory_space<vmem>>, %arg2: memref<1x128xf32, #tpu.memory_space<vmem>>) attributes {dimension_semantics = [#tpu.dimension_semantics<parallel>], iteration_bounds = array<i64: 1>, scalar_prefetch = 0 : i64, scratch_operands = 0 : i64, tpu.core_type = #tpu.core_type<tc>, window_params = [{transform_indices = @transform_0, window_bounds = array<i64: 32, 1152>}, {transform_indices = @transform_1, window_bounds = array<i64: 1, 128>}]} {
    %0 = tpu.iota {dimensions = array<i32: 1>} : vector<8x1152xi32>
    %c9_i32 = arith.constant 9 : i32
    %c0_i32 = arith.constant 0 : i32
    %1 = arith.cmpi eq, %c9_i32, %c0_i32 : i32
    %c1_i32 = arith.constant 1 : i32
    %2 = arith.select %1, %c1_i32, %c9_i32 : i32
    %3 = vector.broadcast %2 : i32 to vector<8x1152xi32>
    %4 = arith.remsi %0, %3 : vector<8x1152xi32>
    %c0_i32_0 = arith.constant 0 : i32
    %5 = vector.broadcast %c0_i32_0 : i32 to vector<8x1152xi32>
    %6 = arith.cmpi ne, %4, %5 : vector<8x1152xi32>
    %c0_i32_1 = arith.constant 0 : i32
    %7 = vector.broadcast %c0_i32_1 : i32 to vector<8x1152xi32>
    %8 = arith.cmpi slt, %4, %7 : vector<8x1152xi32>
    %c0_i32_2 = arith.constant 0 : i32
    %9 = arith.cmpi slt, %2, %c0_i32_2 : i32
    %10 = vector.broadcast %9 : i1 to vector<8x1152xi1>
    %11 = vector.broadcast %10 : vector<8x1152xi1> to vector<8x1152xi1>
    %12 = arith.xori %8, %11 : vector<8x1152xi1>
    %13 = arith.andi %12, %6 : vector<8x1152xi1>
    %14 = vector.broadcast %2 : i32 to vector<8x1152xi32>
    %15 = arith.addi %4, %14 : vector<8x1152xi32>
    %16 = arith.select %13, %15, %4 : vector<8x1152xi1>, vector<8x1152xi32>
    %c0_i32_3 = arith.constant 0 : i32
    %17 = vector.broadcast %c0_i32_3 : i32 to vector<8x1152xi32>
    %18 = arith.cmpi eq, %16, %17 : vector<8x1152xi32>
    %c4_i32 = arith.constant 4 : i32
    %19 = vector.broadcast %c4_i32 : i32 to vector<8x1152xi32>
    %20 = arith.cmpi eq, %16, %19 : vector<8x1152xi32>
    %21 = arith.ori %18, %20 : vector<8x1152xi1>
    %c8_i32 = arith.constant 8 : i32
    %22 = vector.broadcast %c8_i32 : i32 to vector<8x1152xi32>
    %23 = arith.cmpi eq, %16, %22 : vector<8x1152xi32>
    %24 = arith.ori %21, %23 : vector<8x1152xi1>
    %cst = arith.constant 1.000000e+00 : f32
    %cst_4 = arith.constant 0.000000e+00 : f32
    %25 = vector.broadcast %cst : f32 to vector<8x1152xf32>
    %26 = vector.broadcast %cst_4 : f32 to vector<8x1152xf32>
    %27 = arith.select %24, %25, %26 : vector<8x1152xi1>, vector<8x1152xf32>
    %cst_5 = arith.constant 0.000000e+00 : f32
    %28 = vector.broadcast %cst_5 : f32 to vector<8x1152xf32>
    %c0_i32_6 = arith.constant 0 : i32
    %c2_i32 = arith.constant 2 : i32
    %29 = arith.addi %c0_i32_6, %c2_i32 : i32
    %c1_i32_7 = arith.constant 1 : i32
    %30 = scf.for %arg3 = %c0_i32_6 to %29 step %c1_i32_7 iter_args(%arg4 = %28) -> (vector<8x1152xf32>)  : i32 {
      %c16_i32 = arith.constant 16 : i32
      %37 = arith.muli %arg3, %c16_i32 : i32
      %c0_i32_11 = arith.constant 0 : i32
      %38 = arith.addi %37, %c0_i32_11 : i32
      %39 = tpu.assume_multiple %38, 8 : i32
      %40 = arith.index_cast %39 : i32 to index
      %c0_12 = arith.constant 0 : index
      %41 = vector.load %arg1[%40, %c0_12] : memref<32x1152xf32, #tpu.memory_space<vmem>>, vector<8x1152xf32>
      %42 = arith.subf %41, %27 : vector<8x1152xf32>
      %43 = arith.mulf %42, %42 : vector<8x1152xf32>
      %44 = arith.addf %arg4, %43 : vector<8x1152xf32>
      %c8_i32_13 = arith.constant 8 : i32
      %45 = arith.addi %37, %c8_i32_13 : i32
      %46 = tpu.assume_multiple %45, 8 : i32
      %47 = arith.index_cast %46 : i32 to index
      %c0_14 = arith.constant 0 : index
      %48 = vector.load %arg1[%47, %c0_14] : memref<32x1152xf32, #tpu.memory_space<vmem>>, vector<8x1152xf32>
      %49 = arith.subf %48, %27 : vector<8x1152xf32>
      %50 = arith.mulf %49, %49 : vector<8x1152xf32>
      %51 = arith.addf %44, %50 : vector<8x1152xf32>
      scf.yield %51 : vector<8x1152xf32>
    }
    %c2_i32_8 = arith.constant 2 : i32
    %31 = vector.shape_cast %30 : vector<8x1152xf32> to vector<1x8x1152xf32>
    %cst_9 = arith.constant dense<0.000000e+00> : vector<1xf32>
    %32 = vector.multi_reduction <add>, %31, %cst_9 [1, 2] : vector<1x8x1152xf32> to vector<1xf32>
    %33 = vector.shape_cast %32 : vector<1xf32> to vector<1x1x1xf32>
    %34 = vector.extract %33[0, 0, 0] : f32 from vector<1x1x1xf32>
    %35 = vector.broadcast %34 : f32 to vector<1x128xf32>
    %c0 = arith.constant 0 : index
    %c0_10 = arith.constant 0 : index
    %36 = vector.load %arg2[%c0, %c0_10] : memref<1x128xf32, #tpu.memory_space<vmem>>, vector<1x128xf32>
    tpu.vector_store %arg2[%c0, %c0_10], %35 {strides = array<i32>} : memref<1x128xf32, #tpu.memory_space<vmem>>, vector<1x128xf32>,
    return
  }
  func.func @transform_0(%arg0: i32) -> (i32, i32) {
    %c0_i32 = arith.constant 0 : i32
    %c0_i32_0 = arith.constant 0 : i32
    return %arg0, %c0_i32 : i32, i32
  }
  func.func @transform_1(%arg0: i32) -> (i32, i32) {
    %c0_i32 = arith.constant 0 : i32
    %c0_i32_0 = arith.constant 0 : i32
    return %c0_i32, %arg0 : i32, i32
  }
}

</mosaic_0001>

<llo_original>
// kernel: orthogonal_loss.1
$region0: #{orthogonal_loss.1}
  #allocation0 [shape = 'u32[]', space=smem, size = 0x4, offset = 0x4, fixed_abs, tag = 'smem constant byte address 0x4 - core index']
  #allocation1 [shape = 'u32[144,128]{1,0:T(1,128)}', space=vmem, size = 0x12000, scoped, tag = 'internal scratch']
  %s0 = inlined_call_operand.vmem [shape: f32[32,1152], index: 0, kind: input, shape index: {}]
  %s1 = inlined_call_operand.vmem [shape: f32[1,128], index: 1, kind: output, shape index: {}]
  %s2 = sld [smem:[#allocation0]]
  $region21: #{orthogonal_loss.1} parent=0
    _
  %s4 = ssub.s32 1, %s2
  %s5 = scalar_select 0, %s4, %s2
  // Predicated region
  $region2: #{orthogonal_loss.1} parent=0 // pred_check
    _
  $region3: #{orthogonal_loss.1} parent=0 // pred_check_branch
    %7 = sbr.rel (0) target = $region5
  $region4: #{orthogonal_loss.1} parent=0 // pred_region
    _
  $region5: #{orthogonal_loss.1} parent=0 // pred_fallthru
    _
  %v8 = vlaneseq
  %v9 = vand.u32 %v8, 127
  %v10 = vadd.s32 %v9, 128
  %v11 = vadd.s32 %v9, 256
  %v12 = vadd.s32 %v9, 384
  %v13 = vadd.s32 %v9, 512
  %v14 = vadd.s32 %v9, 640
  %v15 = vadd.s32 %v9, 768
  %v16 = vadd.s32 %v9, 896
  %v17 = vadd.s32 %v9, 1024
  %vm18 = vcmp.lt.s32.totalorder %v9, 0
  %v19 = vsub.s32 0, %v9
  %v20 = vsel %vm18, %v19, %v9
  %v21 = vmul.u32.u64.compose %v20, 3817748708
  %v22 = vextract.low.u32 %v21
  %v23 = vextract.high.u32 %v21
  %v24 = vshrl.u32 %v23, 3
  %v25 = vmul.u32 %v24, 9
  %v26 = vsub.s32 %v20, %v25
  %v27 = vsub.s32 0, %v26
  %v28 = vsel %vm18, %v27, %v26
  %vm29 = vcmp.lt.s32.totalorder %v10, 0
  %v30 = vsub.s32 0, %v10
  %v31 = vsel %vm29, %v30, %v10
  %v32 = vmul.u32.u64.compose %v31, 3817748708
  %v33 = vextract.low.u32 %v32
  %v34 = vextract.high.u32 %v32
  %v35 = vshrl.u32 %v34, 3
  %v36 = vmul.u32 %v35, 9
  %v37 = vsub.s32 %v31, %v36
  %v38 = vsub.s32 0, %v37
  %v39 = vsel %vm29, %v38, %v37
  %vm40 = vcmp.lt.s32.totalorder %v11, 0
  %v41 = vsub.s32 0, %v11
  %v42 = vsel %vm40, %v41, %v11
  %v43 = vmul.u32.u64.compose %v42, 3817748708
  %v44 = vextract.low.u32 %v43
  %v45 = vextract.high.u32 %v43
  %v46 = vshrl.u32 %v45, 3
  %v47 = vmul.u32 %v46, 9
  %v48 = vsub.s32 %v42, %v47
  %v49 = vsub.s32 0, %v48
  %v50 = vsel %vm40, %v49, %v48
  %vm51 = vcmp.lt.s32.totalorder %v12, 0
  %v52 = vsub.s32 0, %v12
  %v53 = vsel %vm51, %v52, %v12
  %v54 = vmul.u32.u64.compose %v53, 3817748708
  %v55 = vextract.low.u32 %v54
  %v56 = vextract.high.u32 %v54
  %v57 = vshrl.u32 %v56, 3
  %v58 = vmul.u32 %v57, 9
  %v59 = vsub.s32 %v53, %v58
  %v60 = vsub.s32 0, %v59
  %v61 = vsel %vm51, %v60, %v59
  %vm62 = vcmp.lt.s32.totalorder %v13, 0
  %v63 = vsub.s32 0, %v13
  %v64 = vsel %vm62, %v63, %v13
  %v65 = vmul.u32.u64.compose %v64, 3817748708
  %v66 = vextract.low.u32 %v65
  %v67 = vextract.high.u32 %v65
  %v68 = vshrl.u32 %v67, 3
  %v69 = vmul.u32 %v68, 9
  %v70 = vsub.s32 %v64, %v69
  %v71 = vsub.s32 0, %v70
  %v72 = vsel %vm62, %v71, %v70
  %vm73 = vcmp.lt.s32.totalorder %v14, 0
  %v74 = vsub.s32 0, %v14
  %v75 = vsel %vm73, %v74, %v14
  %v76 = vmul.u32.u64.compose %v75, 3817748708
  %v77 = vextract.low.u32 %v76
  %v78 = vextract.high.u32 %v76
  %v79 = vshrl.u32 %v78, 3
  %v80 = vmul.u32 %v79, 9
  %v81 = vsub.s32 %v75, %v80
  %v82 = vsub.s32 0, %v81
  %v83 = vsel %vm73, %v82, %v81
  %vm84 = vcmp.lt.s32.totalorder %v15, 0
  %v85 = vsub.s32 0, %v15
  %v86 = vsel %vm84, %v85, %v15
  %v87 = vmul.u32.u64.compose %v86, 3817748708
  %v88 = vextract.low.u32 %v87
  %v89 = vextract.high.u32 %v87
  %v90 = vshrl.u32 %v89, 3
  %v91 = vmul.u32 %v90, 9
  %v92 = vsub.s32 %v86, %v91
  %v93 = vsub.s32 0, %v92
  %v94 = vsel %vm84, %v93, %v92
  %vm95 = vcmp.lt.s32.totalorder %v16, 0
  %v96 = vsub.s32 0, %v16
  %v97 = vsel %vm95, %v96, %v16
  %v98 = vmul.u32.u64.compose %v97, 3817748708
  %v99 = vextract.low.u32 %v98
  %v100 = vextract.high.u32 %v98
  %v101 = vshrl.u32 %v100, 3
  %v102 = vmul.u32 %v101, 9
  %v103 = vsub.s32 %v97, %v102
  %v104 = vsub.s32 0, %v103
  %v105 = vsel %vm95, %v104, %v103
  %vm106 = vcmp.lt.s32.totalorder %v17, 0
  %v107 = vsub.s32 0, %v17
  %v108 = vsel %vm106, %v107, %v17
  %v109 = vmul.u32.u64.compose %v108, 3817748708
  %v110 = vextract.low.u32 %v109
  %v111 = vextract.high.u32 %v109
  %v112 = vshrl.u32 %v111, 3
  %v113 = vmul.u32 %v112, 9
  %v114 = vsub.s32 %v108, %v113
  %v115 = vsub.s32 0, %v114
  %v116 = vsel %vm106, %v115, %v114
  %vm117 = vcmp.ne.s32.totalorder %v28, 0
  %vm118 = vcmp.ne.s32.totalorder %v39, 0
  %vm119 = vcmp.ne.s32.totalorder %v50, 0
  %vm120 = vcmp.ne.s32.totalorder %v61, 0
  %vm121 = vcmp.ne.s32.totalorder %v72, 0
  %vm122 = vcmp.ne.s32.totalorder %v83, 0
  %vm123 = vcmp.ne.s32.totalorder %v94, 0
  %vm124 = vcmp.ne.s32.totalorder %v105, 0
  %vm125 = vcmp.ne.s32.totalorder %v116, 0
  %vm126 = vcmp.lt.s32.totalorder %v28, 0
  %vm127 = vcmp.lt.s32.totalorder %v39, 0
  %vm128 = vcmp.lt.s32.totalorder %v50, 0
  %vm129 = vcmp.lt.s32.totalorder %v61, 0
  %vm130 = vcmp.lt.s32.totalorder %v72, 0
  %vm131 = vcmp.lt.s32.totalorder %v83, 0
  %vm132 = vcmp.lt.s32.totalorder %v94, 0
  %vm133 = vcmp.lt.s32.totalorder %v105, 0
  %vm134 = vcmp.lt.s32.totalorder %v116, 0
  %vm135 = vmand %vm126, %vm117
  %vm136 = vmand %vm127, %vm118
  %vm137 = vmand %vm128, %vm119
  %vm138 = vmand %vm129, %vm120
  %vm139 = vmand %vm130, %vm121
  %vm140 = vmand %vm131, %vm122
  %vm141 = vmand %vm132, %vm123
  %vm142 = vmand %vm133, %vm124
  %vm143 = vmand %vm134, %vm125
  %v144 = vadd.s32 %v28, 9
  %v145 = vadd.s32 %v39, 9
  %v146 = vadd.s32 %v50, 9
  %v147 = vadd.s32 %v61, 9
  %v148 = vadd.s32 %v72, 9
  %v149 = vadd.s32 %v83, 9
  %v150 = vadd.s32 %v94, 9
  %v151 = vadd.s32 %v105, 9
  %v152 = vadd.s32 %v116, 9
  %v153 = vsel %vm135, %v144, %v28
  %v154 = vsel %vm136, %v145, %v39
  %v155 = vsel %vm137, %v146, %v50
  %v156 = vsel %vm138, %v147, %v61
  %v157 = vsel %vm139, %v148, %v72
  %v158 = vsel %vm140, %v149, %v83
  %v159 = vsel %vm141, %v150, %v94
  %v160 = vsel %vm142, %v151, %v105
  %v161 = vsel %vm143, %v152, %v116
  %vm162 = vcmp.eq.s32.totalorder %v153, 0
  %vm163 = vcmp.eq.s32.totalorder %v154, 0
  %vm164 = vcmp.eq.s32.totalorder %v155, 0
  %vm165 = vcmp.eq.s32.totalorder %v156, 0
  %vm166 = vcmp.eq.s32.totalorder %v157, 0
  %vm167 = vcmp.eq.s32.totalorder %v158, 0
  %vm168 = vcmp.eq.s32.totalorder %v159, 0
  %vm169 = vcmp.eq.s32.totalorder %v160, 0
  %vm170 = vcmp.eq.s32.totalorder %v161, 0
  %vm171 = vcmp.eq.s32.totalorder %v153, 4
  %vm172 = vcmp.eq.s32.totalorder %v154, 4
  %vm173 = vcmp.eq.s32.totalorder %v155, 4
  %vm174 = vcmp.eq.s32.totalorder %v156, 4
  %vm175 = vcmp.eq.s32.totalorder %v157, 4
  %vm176 = vcmp.eq.s32.totalorder %v158, 4
  %vm177 = vcmp.eq.s32.totalorder %v159, 4
  %vm178 = vcmp.eq.s32.totalorder %v160, 4
  %vm179 = vcmp.eq.s32.totalorder %v161, 4
  %vm180 = vmor %vm162, %vm171
  %vm181 = vmor %vm163, %vm172
  %vm182 = vmor %vm164, %vm173
  %vm183 = vmor %vm165, %vm174
  %vm184 = vmor %vm166, %vm175
  %vm185 = vmor %vm167, %vm176
  %vm186 = vmor %vm168, %vm177
  %vm187 = vmor %vm169, %vm178
  %vm188 = vmor %vm170, %vm179
  %vm189 = vcmp.eq.s32.totalorder %v153, 8
  %vm190 = vcmp.eq.s32.totalorder %v154, 8
  %vm191 = vcmp.eq.s32.totalorder %v155, 8
  %vm192 = vcmp.eq.s32.totalorder %v156, 8
  %vm193 = vcmp.eq.s32.totalorder %v157, 8
  %vm194 = vcmp.eq.s32.totalorder %v158, 8
  %vm195 = vcmp.eq.s32.totalorder %v159, 8
  %vm196 = vcmp.eq.s32.totalorder %v160, 8
  %vm197 = vcmp.eq.s32.totalorder %v161, 8
  %vm198 = vmor %vm180, %vm189
  %vm199 = vmor %vm181, %vm190
  %vm200 = vmor %vm182, %vm191
  %vm201 = vmor %vm183, %vm192
  %vm202 = vmor %vm184, %vm193
  %vm203 = vmor %vm185, %vm194
  %vm204 = vmor %vm186, %vm195
  %vm205 = vmor %vm187, %vm196
  %vm206 = vmor %vm188, %vm197
  %v207 = vsel %vm198, 1.0, 0.0
  %v208 = vsel %vm199, 1.0, 0.0
  %v209 = vsel %vm200, 1.0, 0.0
  %v210 = vsel %vm201, 1.0, 0.0
  %v211 = vsel %vm202, 1.0, 0.0
  %v212 = vsel %vm203, 1.0, 0.0
  %v213 = vsel %vm204, 1.0, 0.0
  %v214 = vsel %vm205, 1.0, 0.0
  %v215 = vsel %vm206, 1.0, 0.0
  loop: start=0, step=1, limit=2
  $region6: #{orthogonal_loss.1} parent=0 // loop_pre_header
    _
  $region7: #{orthogonal_loss.1} parent=0 // loop_header
    %s217 = sphi 0, %s221
    %p218 = scmp.ge.s32.totalorder %s217, 2
    %v222 = vphi 0.0, %v306
    %v223 = vphi 0.0, %v307
    %v224 = vphi 0.0, %v308
    %v225 = vphi 0.0, %v309
    %v226 = vphi 0.0, %v310
    %v227 = vphi 0.0, %v311
    %v228 = vphi 0.0, %v312
    %v229 = vphi 0.0, %v313
    %v230 = vphi 0.0, %v314
  $region8: #{orthogonal_loss.1} parent=0 // loop_header_branch
    %220 = sbr.rel (%p218) target = $region12
  $region9: #{orthogonal_loss.1} parent=0 // loop_body
    %s231 = smul.u32 %s217, 16
    %s232 = sshra.s32 %s231, 3
    %s233 = sand.u32 %s231, 7
    %s234 = smul.u32 %s232, 9
    %s235 = smul.addr %s234, 8
    %s236 = scalar_lea.vmem %s0, %s235
    %v237 = vld [vmem:[%s236] sm:$0xff]
    %v238 = vld [vmem:[%s236 + $0x8] sm:$0xff]
    %v239 = vld [vmem:[%s236 + $0x10] sm:$0xff]
    %v240 = vld [vmem:[%s236 + $0x18] sm:$0xff]
    %v241 = vld [vmem:[%s236 + $0x20] sm:$0xff]
    %v242 = vld [vmem:[%s236 + $0x28] sm:$0xff]
    %v243 = vld [vmem:[%s236 + $0x30] sm:$0xff]
    %v244 = vld [vmem:[%s236 + $0x38] sm:$0xff]
    %v245 = vld [vmem:[%s236 + $0x40] sm:$0xff]
    %v246 = vsub.f32 %v237, %v207
    %v247 = vsub.f32 %v238, %v208
    %v248 = vsub.f32 %v239, %v209
    %v249 = vsub.f32 %v240, %v210
    %v250 = vsub.f32 %v241, %v211
    %v251 = vsub.f32 %v242, %v212
    %v252 = vsub.f32 %v243, %v213
    %v253 = vsub.f32 %v244, %v214
    %v254 = vsub.f32 %v245, %v215
    %v255 = vmul.f32 %v246, %v246
    %v256 = vmul.f32 %v247, %v247
    %v257 = vmul.f32 %v248, %v248
    %v258 = vmul.f32 %v249, %v249
    %v259 = vmul.f32 %v250, %v250
    %v260 = vmul.f32 %v251, %v251
    %v261 = vmul.f32 %v252, %v252
    %v262 = vmul.f32 %v253, %v253
    %v263 = vmul.f32 %v254, %v254
    %v264 = vadd.f32 %v222, %v255
    %v265 = vadd.f32 %v223, %v256
    %v266 = vadd.f32 %v224, %v257
    %v267 = vadd.f32 %v225, %v258
    %v268 = vadd.f32 %v226, %v259
    %v269 = vadd.f32 %v227, %v260
    %v270 = vadd.f32 %v228, %v261
    %v271 = vadd.f32 %v229, %v262
    %v272 = vadd.f32 %v230, %v263
    %s273 = sadd.s32 %s231, 8
    %s274 = sshra.s32 %s273, 3
    %s275 = sand.u32 %s273, 7
    %s276 = smul.u32 %s274, 9
    %s277 = smul.addr %s276, 8
    %s278 = scalar_lea.vmem %s0, %s277
    %v279 = vld [vmem:[%s278] sm:$0xff]
    %v280 = vld [vmem:[%s278 + $0x8] sm:$0xff]
    %v281 = vld [vmem:[%s278 + $0x10] sm:$0xff]
    %v282 = vld [vmem:[%s278 + $0x18] sm:$0xff]
    %v283 = vld [vmem:[%s278 + $0x20] sm:$0xff]
    %v284 = vld [vmem:[%s278 + $0x28] sm:$0xff]
    %v285 = vld [vmem:[%s278 + $0x30] sm:$0xff]
    %v286 = vld [vmem:[%s278 + $0x38] sm:$0xff]
    %v287 = vld [vmem:[%s278 + $0x40] sm:$0xff]
    %v288 = vsub.f32 %v279, %v207
    %v289 = vsub.f32 %v280, %v208
    %v290 = vsub.f32 %v281, %v209
    %v291 = vsub.f32 %v282, %v210
    %v292 = vsub.f32 %v283, %v211
    %v293 = vsub.f32 %v284, %v212
    %v294 = vsub.f32 %v285, %v213
    %v295 = vsub.f32 %v286, %v214
    %v296 = vsub.f32 %v287, %v215
    %v297 = vmul.f32 %v288, %v288
    %v298 = vmul.f32 %v289, %v289
    %v299 = vmul.f32 %v290, %v290
    %v300 = vmul.f32 %v291, %v291
    %v301 = vmul.f32 %v292, %v292
    %v302 = vmul.f32 %v293, %v293
    %v303 = vmul.f32 %v294, %v294
    %v304 = vmul.f32 %v295, %v295
    %v305 = vmul.f32 %v296, %v296
    %v306 = vadd.f32 %v264, %v297
    %v307 = vadd.f32 %v265, %v298
    %v308 = vadd.f32 %v266, %v299
    %v309 = vadd.f32 %v267, %v300
    %v310 = vadd.f32 %v268, %v301
    %v311 = vadd.f32 %v269, %v302
    %v312 = vadd.f32 %v270, %v303
    %v313 = vadd.f32 %v271, %v304
    %v314 = vadd.f32 %v272, %v305
  $region10: #{orthogonal_loss.1} parent=0 // loop_footer
    %s221 = sadd.s32 1, %s217
  $region11: #{orthogonal_loss.1} parent=0 // loop_footer_branch
    %216 = sbr.rel target = $region7
  $region12: #{orthogonal_loss.1} parent=0 // loop_exit
    _
  %v315 = vadd.f32 %v222, %v223
  %v316 = vadd.f32 %v315, %v224
  %v317 = vadd.f32 %v316, %v225
  %v318 = vadd.f32 %v317, %v226
  %v319 = vadd.f32 %v318, %v227
  %v320 = vadd.f32 %v319, %v228
  %v321 = vadd.f32 %v320, %v229
  %v322 = vadd.f32 %v321, %v230
  %323 = vadd.xlane.f32.xlu0 %v322
  %v324 = vpop.xlane.xlu0 %323
  %v325 = vrot.slane %v324, 4
  %v326 = vadd.f32 %v324, %v325
  %v327 = vrot.slane %v326, 2
  %v328 = vadd.f32 %v326, %v327
  %v329 = vrot.slane %v328, 1
  %v330 = vadd.f32 %v328, %v329
  %s331 = vtos %v330
  %v332 = vstv %s331
  %333 = vst [vmem:[%s1] sm:$0x1] %v332
  // Predicated region
  $region13: #{orthogonal_loss.1} parent=0 // pred_check
    _
  $region14: #{orthogonal_loss.1} parent=0 // pred_check_branch
    %335 = sbr.rel (0) target = $region16
  $region15: #{orthogonal_loss.1} parent=0 // pred_region
    _
  $region16: #{orthogonal_loss.1} parent=0 // pred_fallthru
    _
  // Predicated region
  $region17: #{orthogonal_loss.1} parent=0 // pred_check
    _
  $region18: #{orthogonal_loss.1} parent=0 // pred_check_branch
    %337 = sbr.rel (0) target = $region20
  $region19: #{orthogonal_loss.1} parent=0 // pred_region
    _
  $region20: #{orthogonal_loss.1} parent=0 // pred_fallthru
    _

</llo_original>
